<compile_context>
chip_gen: v6e
topology: v6e:2x2x1
jax: 0.10.0
libtpu: 0.0.40
codegen_flags: <defaults>
</compile_context>

<pallas_src>
import functools

import numpy as np
import jax
import jax.numpy as jnp
from jax import lax
from jax.experimental import pallas as pl
from jax.experimental.pallas import tpu as pltpu


CONFIG = dict(
    in_channels=10,
    out_channels=3,          # must equal img_channels (x += rem in reference)
    feat=3,
    activation="relu",
    kernel_size=3,
    num_layers=2,
    img_channels=3,
    use_mask=True,
    downsample_factor=2,
    std_factor=2.0,
    reg_lambda=0.5,
    rgb_feature=True,
    inplace=False,
    univariate=False,
)

# Fixed harmonization constants (rgb_feature=True / inplace=False branch).
_HARM_A = (1.0524, 1.0043, 1.0946)      # r, g, b slope
_HARM_B = (-0.0015, 0.0026, -0.0107)    # r, g, b intercept
_HARM_STD = (0.0163, 0.0136, 0.0128)    # r, g, b std

_RES_SCALE = 0.1                         # ResBlock / HaResBlock scale
_TAPS = tuple((dy, dx) for dy in (-1, 0, 1) for dx in (-1, 0, 1))


# ----------------------------------------------------------------------------
# Roll-direction probe: guarantees the shift convention used below is correct
# regardless of pltpu.roll's sign convention on this backend.
# ----------------------------------------------------------------------------
@functools.lru_cache(maxsize=1)
def _roll_matches_jnp():
    def k(x_ref, o_ref):
        o_ref[...] = pltpu.roll(x_ref[...], 1, axis=1)

    x = jnp.arange(256, dtype=jnp.float32).reshape(1, 256)
    y = np.asarray(
        pl.pallas_call(k, out_shape=jax.ShapeDtypeStruct((1, 256), jnp.float32))(x))
    ref = np.arange(256, dtype=np.float32)
    if np.array_equal(y[0], np.roll(ref, 1)):
        return True
    if np.array_equal(y[0], np.roll(ref, -1)):
        return False
    raise RuntimeError("pltpu.roll produced an unexpected permutation")


# ----------------------------------------------------------------------------
# Fused Pallas kernel: one grid step == bblk images packed into the lane dim.
# ----------------------------------------------------------------------------
def _edsr_vpu_kernel(wvec_ref, tapmask_ref,
                     landsat_ref, cloudy_ref, sentinel_ref, mask_ref, gt_ref,
                     out_ref, loss_ref,
                     *, width, lanes, num_res, num_pred,
                     w_offs, b_offs, ha_off, hb_off, band_off, roll_fwd):
    """Whole EDSR_TRI_LR forward; activations stay in vregs/VMEM.

    Layout: activations are channel-major (C, L) with L = bblk*H*W in lanes.
      wvec_ref    : flat f32 SMEM vector [12x conv W (OIHW flat), 12x bias,
                    harm a(3), harm b(3), coeff*std(3)]
      tapmask_ref : (9, L) per-tap validity masks (zero outside the image)
      landsat/cloudy/sentinel/mask/gt : (3, L) lane-dense inputs
      out_ref     : (3, L)
      loss_ref    : (1, 2) = [sum((out-gt)^2), sum(hinge)]
    """
    f32 = jnp.float32
    L = lanes

    def shifted_taps(row):
        """All 9 zero-padded-shift copies of one (1, L) activation row."""
        taps = []
        for t, (dy, dx) in enumerate(_TAPS):
            s = dy * width + dx
            if s == 0:
                taps.append(row)
            else:
                amt = ((-s) % L) if roll_fwd else (s % L)
                xt = pltpu.roll(row, amt, axis=1)          # XLU lane rotate
                taps.append(xt * tapmask_ref[t:t + 1, :])  # zero the borders
        return taps

    def conv3x3(in_rows, widx, relu):
        """3x3 'same' conv on the VPU (scalar MACs, weights from SMEM)."""
        cin = len(in_rows)
        w0 = w_offs[widx]
        accs = [jnp.zeros((1, L), f32) + wvec_ref[b_offs[widx] + co]
                for co in range(3)]
        for ci in range(cin):
            taps = shifted_taps(in_rows[ci])
            for t in range(9):
                xt = taps[t]
                for co in range(3):
                    w = wvec_ref[w0 + (co * cin + ci) * 9 + t]
                    accs[co] = accs[co] + w * xt
        if relu:
            accs = [jnp.maximum(a, 0.0) for a in accs]
        return accs

    landsat = [landsat_ref[c:c + 1, :] for c in range(3)]
    cloudy = [cloudy_ref[c:c + 1, :] for c in range(3)]
    sentinel = [sentinel_ref[c:c + 1, :] for c in range(3)]

    # ---- first conv (+ReLU); input channels [landsat_up, cloudy, sentinel, mask0]
    x = conv3x3(landsat + cloudy + sentinel + [mask_ref[0:1, :]], 0, relu=True)
    widx = 1

    # ---- ResBlocks
    for _ in range(num_res):
        h = conv3x3(x, widx, relu=True)
        h = conv3x3(h, widx + 1, relu=False)
        x = [h[c] * _RES_SCALE + x[c] for c in range(3)]
        widx += 2

    pred_rgb = x                                   # captured BEFORE HaResBlocks

    # ---- harmonized RGB feature & masked HaResBlock residual
    rgb_feat = [wvec_ref[ha_off + c] * landsat[c] + wvec_ref[hb_off + c]
                for c in range(3)]
    masked_ha = [rgb_feat[c] * mask_ref[c:c + 1, :] for c in range(3)]

    # ---- HaResBlocks
    for _ in range(num_pred):
        h = conv3x3(x, widx, relu=True)
        h = conv3x3(h, widx + 1, relu=False)
        x = [h[c] * _RES_SCALE + masked_ha[c] for c in range(3)]
        widx += 2

    # ---- conv_pred, then x += rem (= cloudy)
    x = conv3x3(x, widx, relu=False)
    x = [x[c] + cloudy[c] for c in range(3)]

    # ---- output store + fused per-block loss partial sums
    sse = jnp.zeros((), f32)
    hsum = jnp.zeros((), f32)
    for c in range(3):
        out_ref[c:c + 1, :] = x[c]
        d = x[c] - gt_ref[c:c + 1, :]
        sse = sse + jnp.sum(d * d)
        band = wvec_ref[band_off + c]
        lo = rgb_feat[c] - band
        hi = rgb_feat[c] + band
        hinge = jnp.maximum(jnp.maximum(lo - pred_rgb[c], pred_rgb[c] - hi), 0.0)
        hsum = hsum + jnp.sum(hinge)
    loss_ref[...] = jnp.concatenate(
        [sse.reshape(1, 1), hsum.reshape(1, 1)], axis=1)


# ----------------------------------------------------------------------------
# Wrapper
# ----------------------------------------------------------------------------
def _pick_bblk(batch, hw, max_lanes=512):
    """Images per grid step: amortize per-step overhead but keep the lane dim
    modest (vreg pressure) and keep >= 2 grid steps for v7x megacore."""
    cap = max(1, max_lanes // hw)
    best = 1
    for cand in range(1, batch + 1):
        if batch % cand or cand > cap:
            continue
        if batch < 2 or batch // cand >= 2:
            best = cand
    return best


def edsr_tri_lr_forward(params, cfg, landsat, sentinel, cloudy, ground_truth, mask):
    f32 = jnp.float32
    B, C, H, W = cloudy.shape
    HW = H * W
    assert HW % 128 == 0, "H*W must be a multiple of 128 (lane dim)"
    oc = cfg["out_channels"]
    f = cfg["downsample_factor"]
    coeff = cfg["std_factor"]
    lam = cfg["reg_lambda"]

    # F.interpolate(mode='nearest', scale_factor=f)
    # TODO(synk): the in-kernel lane gather needed to fuse this nearest upsample
    # has no cheap TPU layout, so it stays as two tiny jnp.repeat ops on host.
    landsat_up = jnp.repeat(jnp.repeat(landsat.astype(f32), f, axis=2), f, axis=3)

    bblk = _pick_bblk(B, HW)
    nblk = B // bblk
    L = bblk * HW

    def to_blocks(t):
        t = t.astype(f32).reshape(nblk, bblk, C, HW)
        return jnp.transpose(t, (0, 2, 1, 3)).reshape(nblk, C, L)

    lan_b, clo_b, sen_b, msk_b, gt_b = map(
        to_blocks, (landsat_up, cloudy, sentinel, mask, ground_truth))

    # Per-tap validity masks (zero where the shifted tap leaves the image),
    # tiled over the bblk images packed into the lane dim.
    q = np.arange(HW)
    hh, ww = q // W, q % W
    tapm = np.stack([((hh + dy >= 0) & (hh + dy < H) &
                      (ww + dx >= 0) & (ww + dx < W)).astype(np.float32)
                     for dy, dx in _TAPS])                       # (9, HW)
    tapmask = jnp.asarray(np.tile(tapm, (1, bblk)))              # (9, L)

    # Flat SMEM parameter vector (order matters).
    conv_list = [(params["conv_w"], params["conv_b"])]
    for p in params["res_l"]:
        conv_list += [(p["w1"], p["b1"]), (p["w2"], p["b2"])]
    for p in params["pred_l"]:
        conv_list += [(p["w1"], p["b1"]), (p["w2"], p["b2"])]
    conv_list.append((params["conv_pred_w"], params["conv_pred_b"]))

    parts, w_offs, b_offs = [], [], []
    cur = 0
    for w, _ in conv_list:
        w_offs.append(cur)
        wo = jnp.transpose(w.astype(f32), (3, 2, 0, 1)).reshape(-1)   # OIHW flat
        parts.append(wo)
        cur += wo.size
    for _, b in conv_list:
        b_offs.append(cur)
        parts.append(b.astype(f32).reshape(-1))
        cur += b.size
    ha_off = cur; parts.append(jnp.asarray(_HARM_A, f32)); cur += 3
    hb_off = cur; parts.append(jnp.asarray(_HARM_B, f32)); cur += 3
    band_off = cur; parts.append(coeff * jnp.asarray(_HARM_STD, f32)); cur += 3
    wvec = jnp.concatenate(parts)

    kernel = functools.partial(
        _edsr_vpu_kernel, width=W, lanes=L,
        num_res=cfg["num_layers"], num_pred=3,
        w_offs=tuple(w_offs), b_offs=tuple(b_offs),
        ha_off=ha_off, hb_off=hb_off, band_off=band_off,
        roll_fwd=_roll_matches_jnp())

    out_b, loss_b = pl.pallas_call(
        kernel,
        out_shape=(jax.ShapeDtypeStruct((nblk, oc, L), f32),
                   jax.ShapeDtypeStruct((nblk, 1, 2), f32)),
        grid=(nblk,),
        in_specs=[
            pl.BlockSpec(memory_space=pltpu.MemorySpace.SMEM),     # params (scalars)
            pl.BlockSpec((9, L), lambda i: (0, 0)),                # tap masks
            pl.BlockSpec((None, C, L), lambda i: (i, 0, 0)),       # landsat_up
            pl.BlockSpec((None, C, L), lambda i: (i, 0, 0)),       # cloudy
            pl.BlockSpec((None, C, L), lambda i: (i, 0, 0)),       # sentinel
            pl.BlockSpec((None, C, L), lambda i: (i, 0, 0)),       # mask
            pl.BlockSpec((None, C, L), lambda i: (i, 0, 0)),       # ground truth
        ],
        out_specs=(pl.BlockSpec((None, oc, L), lambda i: (i, 0, 0)),
                   pl.BlockSpec((None, 1, 2), lambda i: (i, 0, 0))),
        compiler_params=pltpu.CompilerParams(
            dimension_semantics=("parallel",)),
    )(wvec, tapmask, lan_b, clo_b, sen_b, msk_b, gt_b)

    out = (out_b.reshape(nblk, oc, bblk, HW).transpose(0, 2, 1, 3)
           .reshape(B, oc, H, W))
    totals = jnp.sum(loss_b, axis=(0, 1))            # (2,) = [sse, hinge sum]
    mse = totals[0] / (B * oc * HW)                  # F.mse_loss reduction='mean'
    harm = totals[1] / (B * 3 * HW)                  # mean over cat(r,g,b) hinge
    loss = mse + lam * harm
    return out, loss, mse, harm


# ----------------------------------------------------------------------------
# Pure-JAX reference (for an in-script sanity check; warn-only)
# ----------------------------------------------------------------------------
def _reference_forward(params, cfg, landsat, sentinel, cloudy, ground_truth, mask):
    f32 = jnp.float32
    f = cfg["downsample_factor"]
    coeff, lam = cfg["std_factor"], cfg["reg_lambda"]
    landsat = landsat.astype(f32); sentinel = sentinel.astype(f32)
    cloudy = cloudy.astype(f32); gt = ground_truth.astype(f32)
    mask = mask.astype(f32)

    def conv(x, w, b):
        y = lax.conv_general_dilated(
            x, w.astype(f32), (1, 1), "SAME",
            dimension_numbers=("NCHW", "HWIO", "NCHW"),
            precision=lax.Precision.HIGHEST)
        return y + b.astype(f32).reshape(1, -1, 1, 1)

    rem = cloudy
    lup = jnp.repeat(jnp.repeat(landsat, f, axis=2), f, axis=3)
    x = jnp.concatenate([lup, cloudy, sentinel, mask[:, 0:1]], axis=1)
    x = jnp.maximum(conv(x, params["conv_w"], params["conv_b"]), 0.0)
    for p in params["res_l"]:
        h = jnp.maximum(conv(x, p["w1"], p["b1"]), 0.0)
        h = conv(h, p["w2"], p["b2"])
        x = h * _RES_SCALE + x
    pred = x[:, 0:3]
    a = jnp.asarray(_HARM_A, f32).reshape(1, 3, 1, 1)
    bb = jnp.asarray(_HARM_B, f32).reshape(1, 3, 1, 1)
    band = coeff * jnp.asarray(_HARM_STD, f32).reshape(1, 3, 1, 1)
    rgb_feat = a * lup + bb
    for p in params["pred_l"]:
        h = jnp.maximum(conv(x, p["w1"], p["b1"]), 0.0)
        h = conv(h, p["w2"], p["b2"])
        x = h * _RES_SCALE + rgb_feat * mask
    x = conv(x, params["conv_pred_w"], params["conv_pred_b"])
    x = x + rem
    mse = jnp.mean((x - gt) ** 2)
    hinge = jnp.maximum(
        jnp.maximum((rgb_feat - band) - pred, pred - (rgb_feat + band)), 0.0)
    harm = jnp.mean(hinge)
    return x, mse + lam * harm, mse, harm


# ----------------------------------------------------------------------------
# Parameter init (deterministic, synthetic)
# ----------------------------------------------------------------------------
def init_params(key, cfg):
    oc = cfg["out_channels"]
    ks = cfg["kernel_size"]
    cin0 = 3 * cfg["img_channels"] + (1 if cfg["use_mask"] else 0)
    keys = iter(jax.random.split(key, 32))

    def conv_p(cin, cout):
        w = 0.1 * jax.random.normal(next(keys), (ks, ks, cin, cout), jnp.float32)
        b = 0.01 * jax.random.normal(next(keys), (cout,), jnp.float32)
        return w, b

    params = {}
    params["conv_w"], params["conv_b"] = conv_p(cin0, oc)
    params["res_l"] = []
    for _ in range(cfg["num_layers"]):
        w1, b1 = conv_p(oc, oc)
        w2, b2 = conv_p(oc, oc)
        params["res_l"].append(dict(w1=w1, b1=b1, w2=w2, b2=b2))
    params["conv_pred_w"], params["conv_pred_b"] = conv_p(oc, oc)
    params["pred_l"] = []
    for _ in range(3):
        w1, b1 = conv_p(oc, oc)
        w2, b2 = conv_p(oc, oc)
        params["pred_l"].append(dict(w1=w1, b1=b1, w2=w2, b2=b2))
    # TODO(synk): self.deConv (ConvTranspose2d) is never used in forward(); omitted.
    return params


# ----------------------------------------------------------------------------
if __name__ == "__main__":
    cfg = CONFIG
    key = jax.random.PRNGKey(0)
    kp, k1, k2, k3, k4, k5 = jax.random.split(key, 6)

    B, C, H, W = 2, cfg["img_channels"], 16, 16
    f = cfg["downsample_factor"]
    landsat = jax.random.normal(k1, (B, C, H // f, W // f), jnp.float32)
    sentinel = jax.random.normal(k2, (B, C, H, W), jnp.float32)
    cloudy = jax.random.normal(k3, (B, C, H, W), jnp.float32)
    ground_truth = jax.random.normal(k4, (B, C, H, W), jnp.float32)
    mask = (jax.random.uniform(k5, (B, C, H, W)) > 0.5).astype(jnp.float32)

    params = init_params(kp, cfg)
    _roll_matches_jnp()   # resolve the roll convention before jit tracing

    fwd = jax.jit(lambda p, *args: edsr_tri_lr_forward(p, cfg, *args))
    x, loss, mse, harm = fwd(params, landsat, sentinel, cloudy, ground_truth, mask)
    jax.block_until_ready((x, loss, mse, harm))
    assert x.shape == (B, cfg["out_channels"], H, W)
    assert bool(jnp.isfinite(loss))

    # Non-fatal self-check against the pure-JAX reference.
    xr, lr, mr, hr = _reference_forward(params, cfg, landsat, sentinel, cloudy,
                                        ground_truth, mask)
    max_dx = float(jnp.max(jnp.abs(x - xr)))
    max_dl = max(abs(float(loss - lr)), abs(float(mse - mr)), abs(float(harm - hr)))
    if max_dx > 5e-3 or max_dl > 5e-3:
        print(f"WARNING: kernel/reference mismatch max|dx|={max_dx:.3e} "
              f"max|dloss|={max_dl:.3e}")
    print("KERNEL_OK")
</pallas_src>

<mosaic_0001>
module attributes {stable_mosaic.version = 11 : i64} {
  func.func @k(%arg0: memref<1x256xf32, #tpu.memory_space<vmem>>, %arg1: memref<1x256xf32, #tpu.memory_space<vmem>>) attributes {dimension_semantics = [], scalar_prefetch = 0 : i64, scratch_operands = 0 : i64, tpu.core_type = #tpu.core_type<tc>} {
    %c0 = arith.constant 0 : index
    %c0_0 = arith.constant 0 : index
    %0 = vector.load %arg0[%c0, %c0_0] : memref<1x256xf32, #tpu.memory_space<vmem>>, vector<1x256xf32>
    %c1_i32 = arith.constant 1 : i32
    %1 = tpu.dynamic_rotate %0 by %c1_i32 dim 1 : vector<1x256xf32>, i32 -> vector<1x256xf32>
    %c0_1 = arith.constant 0 : index
    %c0_2 = arith.constant 0 : index
    %2 = vector.load %arg1[%c0_1, %c0_2] : memref<1x256xf32, #tpu.memory_space<vmem>>, vector<1x256xf32>
    tpu.vector_store %arg1[%c0_1, %c0_2], %1 {strides = array<i32>} : memref<1x256xf32, #tpu.memory_space<vmem>>, vector<1x256xf32>,
    return
  }
}

</mosaic_0001>

<llo_original>
// kernel: tpu_custom_call.1
$region0: #{tpu_custom_call.1}
  #allocation0 [shape = 'u32[]', space=smem, size = 0x4, offset = 0x4, fixed_abs, tag = 'smem constant byte address 0x4 - core index']
  #allocation1 [shape = 'u32[144,128]{1,0:T(1,128)}', space=vmem, size = 0x12000, scoped, tag = 'internal scratch']
  %s0 = inlined_call_operand.hbm [shape: f32[1,256], index: 0, kind: input, shape index: {}]
  %s1 = inlined_call_operand.hbm [shape: f32[1,256], index: 1, kind: output, shape index: {}]
  %s2 = sld [smem:[#allocation0]]
  $region18: #{tpu_custom_call.1} parent=0
    _
  %s4 = ssub.s32 1, %s2
  %s5 = scalar_select 0, %s4, %s2
  $region1: #{tpu_custom_call.1} parent=0
    #allocation2 [shape = 'u8[1024]{0}', space=vmem, size = 0x400, scoped, tag = 'input window, operand 0, single buffered']
    #allocation3 [shape = 's32[1]{0}', space=sflag, size = 0x4, scoped, tag = 'scoped memory for tpu_custom_call.1']
    #allocation4 [shape = 's32[1]{0}', space=sflag, size = 0x4, scoped, tag = 'scoped memory for tpu_custom_call.1']
    #allocation5 [shape = 'u8[1024]{0}', space=vmem, size = 0x400, scoped, tag = 'output window, operand 0, single buffered']
    %6 = vsyncpa [#allocation3], 0
    %7 = vsyncpa [#allocation4], 0
    // Predicated region
    $region2: #{tpu_custom_call.1} parent=1 // pred_check
      _
    $region3: #{tpu_custom_call.1} parent=1 // pred_check_branch
      %9 = sbr.rel (0) target = $region5
    $region4: #{tpu_custom_call.1} parent=1 // pred_region
      %s11 = ssub.s32 32, 32
      %12 = vsyncadd [#allocation3], %s11
      %s14 = sshll.u32 [#allocation2], 4
      %s15 = int_to_ptr.vmem [resolvable:$true] %s14
      %17 = dma.hbm_to_vmem [thread:$0]  %s0, 32, %s15, [#allocation3]
    $region5: #{tpu_custom_call.1} parent=1 // pred_fallthru
      _
    // Predicated region
    $region6: #{tpu_custom_call.1} parent=1 // pred_check
      _
    $region7: #{tpu_custom_call.1} parent=1 // pred_check_branch
      %19 = sbr.rel (0) target = $region9
    $region8: #{tpu_custom_call.1} parent=1 // pred_region
      %20 = dma.done [#allocation3], 32
    $region9: #{tpu_custom_call.1} parent=1 // pred_fallthru
      _
    %v21 = vld [vmem:[#allocation2] sm:$0x3]
    %v23 = vlaneseq
    %v24 = vshrl.u32 %v23, 7
    %v25 = vsub.s32 0, %v24
    %v26 = vrot.slane %v21, %v25
    %v27 = vlaneseq
    %v28 = vshrl.u32 %v27, 7
    %v29 = vsub.s32 1, %v28
    %v30 = vrot.slane %v21, %v29
    %33 = vrot.lane.b32.xlu0 %v26, 1
    %v34 = vpop.permute.xlu0 %33
    %35 = vrot.lane.b32.xlu0 %v30, 1
    %v36 = vpop.permute.xlu0 %35
    %v37 = vlaneseq
    %v38 = vand.u32 %v37, 127
    %vm39 = vcmp.lt.s32.totalorder %v38, 1
    %v40 = vsel %vm39, %v34, %v36
    %v41 = vsel %vm39, %v36, %v34
    %v44 = vcombine.low %v41, %v40
    %v46 = vunpack.c.l.s4 1966171168
    %v47 = vunpack.c.0.s8 %v46
    %v48 = vlaneseq
    %v49 = vshrl.u32 %v48, 7
    %v50 = vsub.s32 %v47, %v49
    %v51 = vrot.slane %v44, %v50
    %v53 = vunpack.c.l.s4 1966171168
    %v54 = vunpack.c.0.s8 %v53
    %v55 = vlaneseq
    %v56 = vshrl.u32 %v55, 7
    %v57 = vsub.s32 %v54, %v56
    %v58 = vrot.slane %v51, %v57
    %v60 = vlaneseq
    %vm61 = vcmp.ge.s32.totalorder %v60, 0
    %vm62 = vcmp.lt.s32.totalorder %v60, 256
    %vm63 = vmand %vm61, %vm62
    %64 = vst.msk [vmem:[#allocation5] sm:$0x3] %vm63, %v58
    // Predicated region
    $region10: #{tpu_custom_call.1} parent=1 // pred_check
      _
    $region11: #{tpu_custom_call.1} parent=1 // pred_check_branch
      %66 = sbr.rel (0) target = $region13
    $region12: #{tpu_custom_call.1} parent=1 // pred_region
      %s68 = ssub.s32 32, 32
      %69 = vsyncadd [#allocation4], %s68
      %s71 = sshll.u32 [#allocation5], 4
      %s72 = int_to_ptr.vmem [resolvable:$true] %s71
      %74 = dma.vmem_to_hbm [thread:$0]  %s72, 32, %s1, [#allocation4]
    $region13: #{tpu_custom_call.1} parent=1 // pred_fallthru
      _
    // Predicated region
    $region14: #{tpu_custom_call.1} parent=1 // pred_check
      _
    $region15: #{tpu_custom_call.1} parent=1 // pred_check_branch
      %76 = sbr.rel (0) target = $region17
    $region16: #{tpu_custom_call.1} parent=1 // pred_region
      %77 = dma.done [#allocation4], 32
    $region17: #{tpu_custom_call.1} parent=1 // pred_fallthru
      _
    %78 = vsyncpa [#allocation3], 1
    %79 = vsyncpa [#allocation4], 1

</llo_original>
